<compile_context>
chip_gen: v7x
topology: tpu7x:2x2x1
jax: 0.10.0
libtpu: 0.0.40
codegen_flags: <defaults>
</compile_context>

<pallas_src>
import math

import jax
import jax.numpy as jnp
from jax import lax
from jax.experimental import pallas as pl
from jax.experimental.pallas import tpu as pltpu


def _tfe_kernel(x_ref, w_ref, o_ref):
    # x_ref: (TM, F_eff)   w_ref: (D_eff, F_eff)   o_ref: (TM, D_eff)
    y = lax.dot_general(
        x_ref[...], w_ref[...],
        dimension_numbers=(((1,), (1,)), ((), ())),
        precision=lax.Precision.HIGHEST,
        preferred_element_type=jnp.float32,
    )
    o_ref[...] = y.astype(o_ref.dtype)


def _tfe_add_kernel(x_ref, w_ref, r_ref, o_ref):
    # Fused: (x @ W.T) + residual, written once.
    y = lax.dot_general(
        x_ref[...], w_ref[...],
        dimension_numbers=(((1,), (1,)), ((), ())),
        precision=lax.Precision.HIGHEST,
        preferred_element_type=jnp.float32,
    )
    o_ref[...] = (y + r_ref[...].astype(jnp.float32)).astype(o_ref.dtype)


def _packing_factor(M, F, D, w_itemsize):
    """Tokens packed per row so the output block last dim is a multiple of 128."""
    if D % 128 == 0:
        return 1                                    # already lane-dense
    p_out = 128 // math.gcd(D, 128)                 # smallest P with (P*D) % 128 == 0
    p_in = 128 // math.gcd(F, 128)                  # also makes (P*F) % 128 == 0
    p_full = p_out * p_in // math.gcd(p_out, p_in)
    # Keep the block-diagonal weight copy small enough to stay VMEM-resident.
    if M % p_full == 0 and p_full * p_full * D * F * w_itemsize <= (2 << 20):
        return p_full                               # lane-dense input AND output
    if M % p_out == 0 and p_out * p_out * D * F * w_itemsize <= (2 << 20):
        return p_out                                # lane-dense output
    return 1                                        # correct fallback (masked stores)


def time_feature_embedding(
    x,
    weight,
    *,
    residual=None,
    out_dtype=None,
    block_tokens=2048,
    min_pallas_tokens=1024,
    vmem_budget_bytes=20 * 1024 * 1024,
):
    """Forward pass of TimeFeatureEmbedding: bias-free Linear over the last dim.

    x:        [B, L, F]   (F = d_inp, e.g. 4 for freq='h')
    weight:   [D, F]      (PyTorch nn.Linear layout: (out_features, in_features))
    residual: optional [B, L, D] added to the result inside the kernel (fused
              DataEmbedding add: the dominant [M, D] tensor is written once).
    returns   [B, L, D]   (x.dtype unless out_dtype given; bf16 out recommended
              for throughput -- f32 MXU accumulation is kept either way).
    """
    B, L, F = x.shape
    D, F_w = weight.shape
    assert F_w == F, "weight in_features must match x feature dim"
    out_dtype = jnp.dtype(x.dtype if out_dtype is None else out_dtype)
    if residual is not None:
        assert residual.shape == (B, L, D)

    M = B * L

    # Tiny problems: the fixed pallas_call / DMA-setup cost exceeds the op.
    if M < min_pallas_tokens:
        y = jnp.einsum(
            "blf,df->bld", x, weight,
            precision=lax.Precision.HIGHEST,
            preferred_element_type=jnp.float32,
        )
        if residual is not None:
            y = y + residual.astype(jnp.float32)
        return y.astype(out_dtype)

    w_itemsize = jnp.dtype(weight.dtype).itemsize
    P = _packing_factor(M, F, D, w_itemsize)
    M_p, F_eff, D_eff = M // P, P * F, P * D

    # Contiguous views only -- no HBM data movement in the wrapper.
    x2 = x.reshape(M_p, F_eff)
    r2 = None if residual is None else residual.reshape(M_p, D_eff)
    if P == 1:
        w_eff = weight                               # [D, F], consumed as-is (no transpose)
    else:
        # Tiny block-diagonal copy [P*D, P*F]; TODO(synk): hoist to parameter-init time.
        w_eff = jnp.kron(jnp.eye(P, dtype=weight.dtype), weight)

    # Tile size: HBM-bound kernel -> biggest 8-aligned tile under the VMEM budget.
    in_b = jnp.dtype(x.dtype).itemsize
    out_b = out_dtype.itemsize
    res_b = 0 if residual is None else jnp.dtype(residual.dtype).itemsize
    per_row = 2 * (F_eff * in_b + D_eff * out_b + D_eff * res_b)   # double-buffered
    w_bytes = 2 * D_eff * F_eff * w_itemsize
    rows_budget = max(8, ((vmem_budget_bytes - w_bytes) // per_row) // 8 * 8)
    rows_tokens = max(8, (block_tokens // P) // 8 * 8)
    rows_cap = min(rows_budget, rows_tokens)

    if M_p <= rows_cap:
        # Split into >=2 grid steps when there is enough work so both v7x
        # TensorCores are used ("parallel" axis); no-op cost on v5e/v6e.
        half8 = ((pl.cdiv(M_p, 2) + 7) // 8) * 8
        tm = half8 if (256 <= half8 < M_p) else M_p
    else:
        tm = rows_cap
    grid_m = pl.cdiv(M_p, tm)

    cost = pl.CostEstimate(
        flops=2 * M_p * F_eff * D_eff,
        bytes_accessed=(M_p * F_eff * in_b + D_eff * F_eff * w_itemsize
                        + M_p * D_eff * out_b + M_p * D_eff * res_b),
        transcendentals=0,
    )

    x_spec = pl.BlockSpec((tm, F_eff), lambda i: (i, 0))        # token tile
    w_spec = pl.BlockSpec((D_eff, F_eff), lambda i: (0, 0))     # VMEM-resident weight
    o_spec = pl.BlockSpec((tm, D_eff), lambda i: (i, 0))        # lane-dense output tile

    if residual is None:
        kernel, in_specs, args = _tfe_kernel, [x_spec, w_spec], (x2, w_eff)
    else:
        kernel, in_specs, args = _tfe_add_kernel, [x_spec, w_spec, o_spec], (x2, w_eff, r2)

    out2 = pl.pallas_call(
        kernel,
        out_shape=jax.ShapeDtypeStruct((M_p, D_eff), out_dtype),
        grid_spec=pltpu.PrefetchScalarGridSpec(
            num_scalar_prefetch=0,
            grid=(grid_m,),
            in_specs=in_specs,
            out_specs=o_spec,
        ),
        compiler_params=pltpu.CompilerParams(
            dimension_semantics=("parallel",),
            vmem_limit_bytes=32 * 1024 * 1024,   # > v5e's 16 MiB scoped default; safe on all gens
        ),
        cost_estimate=cost,
    )(*args)

    return out2.reshape(B, L, D)   # free contiguous view back to per-token rows


if __name__ == "__main__":
    key = jax.random.PRNGKey(0)
    k1, k2, k3, k4, k5 = jax.random.split(key, 5)

    # Small shapes consistent with the module: freq='h' -> d_inp=4, d_model=32.
    B, L, F, D = 2, 8, 4, 32
    x = jax.random.normal(k1, (B, L, F), dtype=jnp.float32)
    w = jax.random.normal(k2, (D, F), dtype=jnp.float32) * 0.1
    ref = jnp.einsum("blf,df->bld", x, w, precision=lax.Precision.HIGHEST)

    # Tiny M short-circuits to the fused XLA path (pallas fixed cost not worth it).
    out_small = jax.block_until_ready(time_feature_embedding(x, w))
    assert out_small.shape == (B, L, D)
    assert jnp.allclose(out_small, ref, atol=1e-5, rtol=1e-5)

    # Same tiny shapes forced through the Pallas kernel (packed lane-dense path).
    out_small_pl = jax.block_until_ready(
        time_feature_embedding(x, w, min_pallas_tokens=0))
    assert jnp.allclose(out_small_pl, ref, atol=1e-5, rtol=1e-5)

    # Multi-block grid with a ragged last tile: M = 4*2000 = 8000, P = 32 packing
    # (input and output both lane-dense), tiles of 64 packed rows = 2048 tokens.
    B2, L2 = 4, 2000
    x_big = jax.random.normal(k3, (B2, L2, F), dtype=jnp.float32)
    ref_big = jnp.einsum("blf,df->bld", x_big, w, precision=lax.Precision.HIGHEST)
    out_big = jax.block_until_ready(time_feature_embedding(x_big, w))
    assert out_big.shape == (B2, L2, D)
    assert jnp.allclose(out_big, ref_big, atol=1e-5, rtol=1e-5)

    # bf16 storage for inputs AND output (the dominant HBM write); f32 MXU accum.
    x_bf = x_big.astype(jnp.bfloat16)
    w_bf = w.astype(jnp.bfloat16)
    out_bf = jax.block_until_ready(
        time_feature_embedding(x_bf, w_bf, out_dtype=jnp.bfloat16))
    ref_bf = jnp.einsum(
        "blf,df->bld", x_bf.astype(jnp.float32), w_bf.astype(jnp.float32),
        precision=lax.Precision.HIGHEST)
    assert jnp.allclose(out_bf.astype(jnp.float32), ref_bf, atol=3e-2, rtol=3e-2)

    # Fused downstream add (DataEmbedding: value_emb + time_emb) -- the dominant
    # [M, D] tensor is written to HBM only once.
    res = jax.random.normal(k4, (B2, L2, D), dtype=jnp.float32)
    out_fused = jax.block_until_ready(
        time_feature_embedding(x_big, w, residual=res))
    assert jnp.allclose(out_fused, ref_big + res, atol=1e-5, rtol=1e-5)

    # d_model multiple of 128: P=1 path (weight consumed in [D, F] layout, no
    # transpose), grid split into 2 steps for v7x megacore.
    D3, B3, L3 = 128, 2, 640
    w3 = jax.random.normal(k5, (D3, F), dtype=jnp.float32) * 0.1
    x3 = jax.random.normal(k1, (B3, L3, F), dtype=jnp.float32)
    out3 = jax.block_until_ready(time_feature_embedding(x3, w3))
    ref3 = jnp.einsum("blf,df->bld", x3, w3, precision=lax.Precision.HIGHEST)
    assert jnp.allclose(out3, ref3, atol=1e-5, rtol=1e-5)

    print("KERNEL_OK")
</pallas_src>

<mosaic_0001>
module attributes {stable_mosaic.version = 11 : i64} {
  func.func @_tfe_kernel(%arg0: i32, %arg1: memref<4x16xf32, #tpu.memory_space<vmem>>, %arg2: memref<128x16xf32, #tpu.memory_space<vmem>>, %arg3: memref<4x128xf32, #tpu.memory_space<vmem>>) attributes {dimension_semantics = [#tpu.dimension_semantics<parallel>], iteration_bounds = array<i64: 1>, scalar_prefetch = 0 : i64, scratch_operands = 0 : i64, tpu.core_type = #tpu.core_type<tc>, window_params = [{transform_indices = @transform_0, window_bounds = array<i64: 4, 16>}, {pipeline_mode = #tpu.pipeline_mode<synchronous>, transform_indices = @transform_1, window_bounds = array<i64: 128, 16>}, {transform_indices = @transform_2, window_bounds = array<i64: 4, 128>}]} {
    %c0 = arith.constant 0 : index
    %c0_0 = arith.constant 0 : index
    %0 = vector.load %arg1[%c0, %c0_0] : memref<4x16xf32, #tpu.memory_space<vmem>>, vector<4x16xf32>
    %c0_1 = arith.constant 0 : index
    %c0_2 = arith.constant 0 : index
    %1 = vector.load %arg2[%c0_1, %c0_2] : memref<128x16xf32, #tpu.memory_space<vmem>>, vector<128x16xf32>
    %cst = arith.constant dense<0.000000e+00> : vector<4x128xf32>
    %2 = tpu.matmul %0, %1, %cst {dimension_numbers = #tpu.dot_dimension_numbers<[1], [1], [0], [0], [0, 0, 1, 0], [], []>, precision = #tpu.contract_precision<fp32>} : vector<4x16xf32>, vector<128x16xf32>, vector<4x128xf32> -> vector<4x128xf32>
    %c0_3 = arith.constant 0 : index
    %c0_4 = arith.constant 0 : index
    %3 = vector.load %arg3[%c0_3, %c0_4] : memref<4x128xf32, #tpu.memory_space<vmem>>, vector<4x128xf32>
    tpu.vector_store %arg3[%c0_3, %c0_4], %2 {strides = array<i32>} : memref<4x128xf32, #tpu.memory_space<vmem>>, vector<4x128xf32>,
    return
  }
  func.func @transform_0(%arg0: i32) -> (i32, i32) {
    %c0_i32 = arith.constant 0 : i32
    %c0_i32_0 = arith.constant 0 : i32
    return %arg0, %c0_i32 : i32, i32
  }
  func.func @transform_1(%arg0: i32) -> (i32, i32) {
    %c0_i32 = arith.constant 0 : i32
    %c0_i32_0 = arith.constant 0 : i32
    %c0_i32_1 = arith.constant 0 : i32
    return %c0_i32, %c0_i32_0 : i32, i32
  }
  func.func @transform_2(%arg0: i32) -> (i32, i32) {
    %c0_i32 = arith.constant 0 : i32
    %c0_i32_0 = arith.constant 0 : i32
    return %arg0, %c0_i32 : i32, i32
  }
}

</mosaic_0001>

<llo_original>
// kernel: tpu_custom_call.1
$region0: #{tpu_custom_call.1}
  #allocation0 [shape = 'u32[]', space=smem, size = 0x4, offset = 0x4, fixed_abs, tag = 'smem constant byte address 0x4 - core index']
  #allocation1 [shape = 'u32[144,128]{1,0:T(1,128)}', space=vmem, size = 0x12000, scoped, tag = 'internal scratch']
  %s0 = inlined_call_operand.vmem [shape: f32[4,16], index: 0, kind: input, shape index: {}]
  %s1 = inlined_call_operand.vmem [shape: f32[128,16], index: 1, kind: input, shape index: {}]
  %s2 = inlined_call_operand.hbm [shape: f32[4,128], index: 2, kind: output, shape index: {}]
  %s3 = sld [smem:[#allocation0]]
  $region18: #{tpu_custom_call.1} parent=0
    _
  %s5 = ssub.s32 1, %s3
  %s6 = scalar_select 0, %s5, %s3
  $region1: #{tpu_custom_call.1} parent=0
    #allocation2 [shape = 'u8[2048]{0}', space=vmem, size = 0x800, scoped, tag = 'output window, operand 0, single buffered']
    #allocation3 [shape = 's32[1]{0}', space=sflag, size = 0x4, scoped, tag = 'scoped memory for tpu_custom_call.1']
    %7 = vsyncpa [#allocation3], 0
    // Predicated region
    $region2: #{tpu_custom_call.1} parent=1 // pred_check
      _
    $region3: #{tpu_custom_call.1} parent=1 // pred_check_branch
      %9 = sbr.rel (0) target = $region5
    $region4: #{tpu_custom_call.1} parent=1 // pred_region
      _
    $region5: #{tpu_custom_call.1} parent=1 // pred_fallthru
      _
    // Predicated region
    $region6: #{tpu_custom_call.1} parent=1 // pred_check
      _
    $region7: #{tpu_custom_call.1} parent=1 // pred_check_branch
      %11 = sbr.rel (0) target = $region9
    $region8: #{tpu_custom_call.1} parent=1 // pred_region
      _
    $region9: #{tpu_custom_call.1} parent=1 // pred_fallthru
      _
    %v12 = vld [vmem:[%s0] sm:$0xf]
    %v13 = vld [vmem:[%s1] sm:$0xff]
    %v14 = vld [vmem:[%s1 + $0x8] sm:$0xff]
    %v15 = vld [vmem:[%s1 + $0x10] sm:$0xff]
    %v16 = vld [vmem:[%s1 + $0x18] sm:$0xff]
    %v17 = vld [vmem:[%s1 + $0x20] sm:$0xff]
    %v18 = vld [vmem:[%s1 + $0x28] sm:$0xff]
    %v19 = vld [vmem:[%s1 + $0x30] sm:$0xff]
    %v20 = vld [vmem:[%s1 + $0x38] sm:$0xff]
    %v21 = vld [vmem:[%s1 + $0x40] sm:$0xff]
    %v22 = vld [vmem:[%s1 + $0x48] sm:$0xff]
    %v23 = vld [vmem:[%s1 + $0x50] sm:$0xff]
    %v24 = vld [vmem:[%s1 + $0x58] sm:$0xff]
    %v25 = vld [vmem:[%s1 + $0x60] sm:$0xff]
    %v26 = vld [vmem:[%s1 + $0x68] sm:$0xff]
    %v27 = vld [vmem:[%s1 + $0x70] sm:$0xff]
    %v28 = vld [vmem:[%s1 + $0x78] sm:$0xff]
    %vm29 = vcmask 130048
    %v31 = vsel %vm29, %v12, 0
    %v34 = vsel %vm29, %v13, 0
    %v37 = vsel %vm29, %v14, 0
    %v40 = vsel %vm29, %v15, 0
    %v43 = vsel %vm29, %v16, 0
    %v46 = vsel %vm29, %v17, 0
    %v49 = vsel %vm29, %v18, 0
    %v52 = vsel %vm29, %v19, 0
    %v55 = vsel %vm29, %v20, 0
    %v58 = vsel %vm29, %v21, 0
    %v61 = vsel %vm29, %v22, 0
    %v64 = vsel %vm29, %v23, 0
    %v67 = vsel %vm29, %v24, 0
    %v70 = vsel %vm29, %v25, 0
    %v73 = vsel %vm29, %v26, 0
    %v76 = vsel %vm29, %v27, 0
    %v79 = vsel %vm29, %v28, 0
    %81 = vmatprep.subr.mxu0 0.0
    %v82 = vand.u32 %v34, 4294901760
    %83 = vmatpush1.xpose.msra.mxu0 %v82
    %84 = vmatprep.subr.mxu0 0.0
    %v85 = vand.u32 %v37, 4294901760
    %86 = vmatpush1.xpose.msra.mxu0 %v85
    %87 = vmatprep.subr.mxu0 0.0
    %v88 = vand.u32 %v40, 4294901760
    %89 = vmatpush1.xpose.msra.mxu0 %v88
    %90 = vmatprep.subr.mxu0 0.0
    %v91 = vand.u32 %v43, 4294901760
    %92 = vmatpush1.xpose.msra.mxu0 %v91
    %93 = vmatprep.subr.mxu0 0.0
    %v94 = vand.u32 %v46, 4294901760
    %95 = vmatpush1.xpose.msra.mxu0 %v94
    %96 = vmatprep.subr.mxu0 0.0
    %v97 = vand.u32 %v49, 4294901760
    %98 = vmatpush1.xpose.msra.mxu0 %v97
    %99 = vmatprep.subr.mxu0 0.0
    %v100 = vand.u32 %v52, 4294901760
    %101 = vmatpush1.xpose.msra.mxu0 %v100
    %102 = vmatprep.subr.mxu0 0.0
    %v103 = vand.u32 %v55, 4294901760
    %104 = vmatpush1.xpose.msra.mxu0 %v103
    %105 = vmatprep.subr.mxu0 0.0
    %v106 = vand.u32 %v58, 4294901760
    %107 = vmatpush1.xpose.msra.mxu0 %v106
    %108 = vmatprep.subr.mxu0 0.0
    %v109 = vand.u32 %v61, 4294901760
    %110 = vmatpush1.xpose.msra.mxu0 %v109
    %111 = vmatprep.subr.mxu0 0.0
    %v112 = vand.u32 %v64, 4294901760
    %113 = vmatpush1.xpose.msra.mxu0 %v112
    %114 = vmatprep.subr.mxu0 0.0
    %v115 = vand.u32 %v67, 4294901760
    %116 = vmatpush1.xpose.msra.mxu0 %v115
    %117 = vmatprep.subr.mxu0 0.0
    %v118 = vand.u32 %v70, 4294901760
    %119 = vmatpush1.xpose.msra.mxu0 %v118
    %120 = vmatprep.subr.mxu0 0.0
    %v121 = vand.u32 %v73, 4294901760
    %122 = vmatpush1.xpose.msra.mxu0 %v121
    %123 = vmatprep.subr.mxu0 0.0
    %v124 = vand.u32 %v76, 4294901760
    %125 = vmatpush1.xpose.msra.mxu0 %v124
    %126 = vmatprep.subr.mxu0 0.0
    %v127 = vand.u32 %v79, 4294901760
    %128 = vmatpush1.xpose.msra.mxu0 %v127
    %129 = vmatprep.subr.mxu0 0.0
    %130 = vmatpush1.xpose.msra.mxu0 0.0
    %131 = vmatprep.subr.mxu0 0.0
    %132 = vmatpush1.xpose.msra.mxu0 0.0
    %133 = vmatprep.subr.mxu0 0.0
    %134 = vmatpush1.xpose.msra.mxu0 0.0
    %135 = vmatprep.subr.mxu0 0.0
    %136 = vmatpush1.xpose.msra.mxu0 0.0
    %137 = vmatprep.subr.mxu0 0.0
    %138 = vmatpush1.xpose.msra.mxu0 0.0
    %139 = vmatprep.subr.mxu0 0.0
    %140 = vmatpush1.xpose.msra.mxu0 0.0
    %141 = vmatprep.subr.mxu0 0.0
    %142 = vmatpush1.xpose.msra.mxu0 0.0
    %143 = vmatprep.subr.mxu0 0.0
    %144 = vmatpush1.xpose.msra.mxu0 0.0
    %145 = vmatprep.subr.mxu0 0.0
    %146 = vmatpush1.xpose.msra.mxu0 0.0
    %147 = vmatprep.subr.mxu0 0.0
    %148 = vmatpush1.xpose.msra.mxu0 0.0
    %149 = vmatprep.subr.mxu0 0.0
    %150 = vmatpush1.xpose.msra.mxu0 0.0
    %151 = vmatprep.subr.mxu0 0.0
    %152 = vmatpush1.xpose.msra.mxu0 0.0
    %153 = vmatprep.subr.mxu0 0.0
    %154 = vmatpush1.xpose.msra.mxu0 0.0
    %155 = vmatprep.subr.mxu0 0.0
    %156 = vmatpush1.xpose.msra.mxu0 0.0
    %157 = vmatprep.subr.mxu0 0.0
    %158 = vmatpush1.xpose.msra.mxu0 0.0
    %159 = vmatprep.subr.mxu0 0.0
    %160 = vmatpush1.xpose.msra.mxu0 0.0
    %161 = vmatprep.mubr.f32.mxu0 0.0
    %v162 = vand.u32 %v31, 4294901760
    %v163 = vsub.f32 %v31, %v162
    %v164 = vand.u32 %v163, 4294901760
    %v165 = vsub.f32 %v163, %v164
    %v166 = vand.u32 %v165, 4294901760
    %167 = vmatmul.mubr.f32.gmra.mrb[0].mxu0 %v166
    %v168 = vpop.f32.mrb[0].mxu0
    %v169 = vadd.f32 0.0, %v168
    %v170 = vpop.f32.mrb[0].mxu0
    %171 = vdwg.mxu0
    %172 = vmatprep.subr.mxu0 0.0
    %v173 = vand.u32 %v34, 4294901760
    %v174 = vsub.f32 %v34, %v173
    %v175 = vand.u32 %v174, 4294901760
    %v176 = vsub.f32 %v174, %v175
    %v177 = vand.u32 %v176, 4294901760
    %178 = vmatpush1.xpose.msra.mxu0 %v177
    %179 = vmatprep.subr.mxu0 0.0
    %v180 = vand.u32 %v37, 4294901760
    %v181 = vsub.f32 %v37, %v180
    %v182 = vand.u32 %v181, 4294901760
    %v183 = vsub.f32 %v181, %v182
    %v184 = vand.u32 %v183, 4294901760
    %185 = vmatpush1.xpose.msra.mxu0 %v184
    %186 = vmatprep.subr.mxu0 0.0
    %v187 = vand.u32 %v40, 4294901760
    %v188 = vsub.f32 %v40, %v187
    %v189 = vand.u32 %v188, 4294901760
    %v190 = vsub.f32 %v188, %v189
    %v191 = vand.u32 %v190, 4294901760
    %192 = vmatpush1.xpose.msra.mxu0 %v191
    %193 = vmatprep.subr.mxu0 0.0
    %v194 = vand.u32 %v43, 4294901760
    %v195 = vsub.f32 %v43, %v194
    %v196 = vand.u32 %v195, 4294901760
    %v197 = vsub.f32 %v195, %v196
    %v198 = vand.u32 %v197, 4294901760
    %199 = vmatpush1.xpose.msra.mxu0 %v198
    %200 = vmatprep.subr.mxu0 0.0
    %v201 = vand.u32 %v46, 4294901760
    %v202 = vsub.f32 %v46, %v201
    %v203 = vand.u32 %v202, 4294901760
    %v204 = vsub.f32 %v202, %v203
    %v205 = vand.u32 %v204, 4294901760
    %206 = vmatpush1.xpose.msra.mxu0 %v205
    %207 = vmatprep.subr.mxu0 0.0
    %v208 = vand.u32 %v49, 4294901760
    %v209 = vsub.f32 %v49, %v208
    %v210 = vand.u32 %v209, 4294901760
    %v211 = vsub.f32 %v209, %v210
    %v212 = vand.u32 %v211, 4294901760
    %213 = vmatpush1.xpose.msra.mxu0 %v212
    %214 = vmatprep.subr.mxu0 0.0
    %v215 = vand.u32 %v52, 4294901760
    %v216 = vsub.f32 %v52, %v215
    %v217 = vand.u32 %v216, 4294901760
    %v218 = vsub.f32 %v216, %v217
    %v219 = vand.u32 %v218, 4294901760
    %220 = vmatpush1.xpose.msra.mxu0 %v219
    %221 = vmatprep.subr.mxu0 0.0
    %v222 = vand.u32 %v55, 4294901760
    %v223 = vsub.f32 %v55, %v222
    %v224 = vand.u32 %v223, 4294901760
    %v225 = vsub.f32 %v223, %v224
    %v226 = vand.u32 %v225, 4294901760
    %227 = vmatpush1.xpose.msra.mxu0 %v226
    %228 = vmatprep.subr.mxu0 0.0
    %v229 = vand.u32 %v58, 4294901760
    %v230 = vsub.f32 %v58, %v229
    %v231 = vand.u32 %v230, 4294901760
    %v232 = vsub.f32 %v230, %v231
    %v233 = vand.u32 %v232, 4294901760
    %234 = vmatpush1.xpose.msra.mxu0 %v233
    %235 = vmatprep.subr.mxu0 0.0
    %v236 = vand.u32 %v61, 4294901760
    %v237 = vsub.f32 %v61, %v236
    %v238 = vand.u32 %v237, 4294901760
    %v239 = vsub.f32 %v237, %v238
    %v240 = vand.u32 %v239, 4294901760
    %241 = vmatpush1.xpose.msra.mxu0 %v240
    %242 = vmatprep.subr.mxu0 0.0
    %v243 = vand.u32 %v64, 4294901760
    %v244 = vsub.f32 %v64, %v243
    %v245 = vand.u32 %v244, 4294901760
    %v246 = vsub.f32 %v244, %v245
    %v247 = vand.u32 %v246, 4294901760
    %248 = vmatpush1.xpose.msra.mxu0 %v247
    %249 = vmatprep.subr.mxu0 0.0
    %v250 = vand.u32 %v67, 4294901760
    %v251 = vsub.f32 %v67, %v250
    %v252 = vand.u32 %v251, 4294901760
    %v253 = vsub.f32 %v251, %v252
    %v254 = vand.u32 %v253, 4294901760
    %255 = vmatpush1.xpose.msra.mxu0 %v254
    %256 = vmatprep.subr.mxu0 0.0
    %v257 = vand.u32 %v70, 4294901760
    %v258 = vsub.f32 %v70, %v257
    %v259 = vand.u32 %v258, 4294901760
    %v260 = vsub.f32 %v258, %v259
    %v261 = vand.u32 %v260, 4294901760
    %262 = vmatpush1.xpose.msra.mxu0 %v261
    %263 = vmatprep.subr.mxu0 0.0
    %v264 = vand.u32 %v73, 4294901760
    %v265 = vsub.f32 %v73, %v264
    %v266 = vand.u32 %v265, 4294901760
    %v267 = vsub.f32 %v265, %v266
    %v268 = vand.u32 %v267, 4294901760
    %269 = vmatpush1.xpose.msra.mxu0 %v268
    %270 = vmatprep.subr.mxu0 0.0
    %v271 = vand.u32 %v76, 4294901760
    %v272 = vsub.f32 %v76, %v271
    %v273 = vand.u32 %v272, 4294901760
    %v274 = vsub.f32 %v272, %v273
    %v275 = vand.u32 %v274, 4294901760
    %276 = vmatpush1.xpose.msra.mxu0 %v275
    %277 = vmatprep.subr.mxu0 0.0
    %v278 = vand.u32 %v79, 4294901760
    %v279 = vsub.f32 %v79, %v278
    %v280 = vand.u32 %v279, 4294901760
    %v281 = vsub.f32 %v279, %v280
    %v282 = vand.u32 %v281, 4294901760
    %283 = vmatpush1.xpose.msra.mxu0 %v282
    %284 = vmatprep.subr.mxu0 0.0
    %285 = vmatpush1.xpose.msra.mxu0 0.0
    %286 = vmatprep.subr.mxu0 0.0
    %287 = vmatpush1.xpose.msra.mxu0 0.0
    %288 = vmatprep.subr.mxu0 0.0
    %289 = vmatpush1.xpose.msra.mxu0 0.0
    %290 = vmatprep.subr.mxu0 0.0
    %291 = vmatpush1.xpose.msra.mxu0 0.0
    %292 = vmatprep.subr.mxu0 0.0
    %293 = vmatpush1.xpose.msra.mxu0 0.0
    %294 = vmatprep.subr.mxu0 0.0
    %295 = vmatpush1.xpose.msra.mxu0 0.0
    %296 = vmatprep.subr.mxu0 0.0
    %297 = vmatpush1.xpose.msra.mxu0 0.0
    %298 = vmatprep.subr.mxu0 0.0
    %299 = vmatpush1.xpose.msra.mxu0 0.0
    %300 = vmatprep.subr.mxu0 0.0
    %301 = vmatpush1.xpose.msra.mxu0 0.0
    %302 = vmatprep.subr.mxu0 0.0
    %303 = vmatpush1.xpose.msra.mxu0 0.0
    %304 = vmatprep.subr.mxu0 0.0
    %305 = vmatpush1.xpose.msra.mxu0 0.0
    %306 = vmatprep.subr.mxu0 0.0
    %307 = vmatpush1.xpose.msra.mxu0 0.0
    %308 = vmatprep.subr.mxu0 0.0
    %309 = vmatpush1.xpose.msra.mxu0 0.0
    %310 = vmatprep.subr.mxu0 0.0
    %311 = vmatpush1.xpose.msra.mxu0 0.0
    %312 = vmatprep.subr.mxu0 0.0
    %313 = vmatpush1.xpose.msra.mxu0 0.0
    %314 = vmatprep.subr.mxu0 0.0
    %315 = vmatpush1.xpose.msra.mxu0 0.0
    %316 = vmatprep.mubr.f32.mxu0 0.0
    %v317 = vand.u32 %v31, 4294901760
    %318 = vmatmul.mubr.f32.gmra.mrb[0].mxu0 %v317
    %v319 = vpop.f32.mrb[0].mxu0
    %v320 = vadd.f32 %v169, %v319
    %v321 = vpop.f32.mrb[0].mxu0
    %322 = vdwg.mxu0
    %323 = vmatprep.subr.mxu0 0.0
    %v324 = vand.u32 %v34, 4294901760
    %v325 = vsub.f32 %v34, %v324
    %326 = vmatpush1.xpose.msra.mxu0 %v325
    %327 = vmatprep.subr.mxu0 0.0
    %v328 = vand.u32 %v37, 4294901760
    %v329 = vsub.f32 %v37, %v328
    %330 = vmatpush1.xpose.msra.mxu0 %v329
    %331 = vmatprep.subr.mxu0 0.0
    %v332 = vand.u32 %v40, 4294901760
    %v333 = vsub.f32 %v40, %v332
    %334 = vmatpush1.xpose.msra.mxu0 %v333
    %335 = vmatprep.subr.mxu0 0.0
    %v336 = vand.u32 %v43, 4294901760
    %v337 = vsub.f32 %v43, %v336
    %338 = vmatpush1.xpose.msra.mxu0 %v337
    %339 = vmatprep.subr.mxu0 0.0
    %v340 = vand.u32 %v46, 4294901760
    %v341 = vsub.f32 %v46, %v340
    %342 = vmatpush1.xpose.msra.mxu0 %v341
    %343 = vmatprep.subr.mxu0 0.0
    %v344 = vand.u32 %v49, 4294901760
    %v345 = vsub.f32 %v49, %v344
    %346 = vmatpush1.xpose.msra.mxu0 %v345
    %347 = vmatprep.subr.mxu0 0.0
    %v348 = vand.u32 %v52, 4294901760
    %v349 = vsub.f32 %v52, %v348
    %350 = vmatpush1.xpose.msra.mxu0 %v349
    %351 = vmatprep.subr.mxu0 0.0
    %v352 = vand.u32 %v55, 4294901760
    %v353 = vsub.f32 %v55, %v352
    %354 = vmatpush1.xpose.msra.mxu0 %v353
    %355 = vmatprep.subr.mxu0 0.0
    %v356 = vand.u32 %v58, 4294901760
    %v357 = vsub.f32 %v58, %v356
    %358 = vmatpush1.xpose.msra.mxu0 %v357
    %359 = vmatprep.subr.mxu0 0.0
    %v360 = vand.u32 %v61, 4294901760
    %v361 = vsub.f32 %v61, %v360
    %362 = vmatpush1.xpose.msra.mxu0 %v361
    %363 = vmatprep.subr.mxu0 0.0
    %v364 = vand.u32 %v64, 4294901760
    %v365 = vsub.f32 %v64, %v364
    %366 = vmatpush1.xpose.msra.mxu0 %v365
    %367 = vmatprep.subr.mxu0 0.0
    %v368 = vand.u32 %v67, 4294901760
    %v369 = vsub.f32 %v67, %v368
    %370 = vmatpush1.xpose.msra.mxu0 %v369
    %371 = vmatprep.subr.mxu0 0.0
    %v372 = vand.u32 %v70, 4294901760
    %v373 = vsub.f32 %v70, %v372
    %374 = vmatpush1.xpose.msra.mxu0 %v373
    %375 = vmatprep.subr.mxu0 0.0
    %v376 = vand.u32 %v73, 4294901760
    %v377 = vsub.f32 %v73, %v376
    %378 = vmatpush1.xpose.msra.mxu0 %v377
    %379 = vmatprep.subr.mxu0 0.0
    %v380 = vand.u32 %v76, 4294901760
    %v381 = vsub.f32 %v76, %v380
    %382 = vmatpush1.xpose.msra.mxu0 %v381
    %383 = vmatprep.subr.mxu0 0.0
    %v384 = vand.u32 %v79, 4294901760
    %v385 = vsub.f32 %v79, %v384
    %386 = vmatpush1.xpose.msra.mxu0 %v385
    %387 = vmatprep.subr.mxu0 0.0
    %388 = vmatpush1.xpose.msra.mxu0 0.0
    %389 = vmatprep.subr.mxu0 0.0
    %390 = vmatpush1.xpose.msra.mxu0 0.0
    %391 = vmatprep.subr.mxu0 0.0
    %392 = vmatpush1.xpose.msra.mxu0 0.0
    %393 = vmatprep.subr.mxu0 0.0
    %394 = vmatpush1.xpose.msra.mxu0 0.0
    %395 = vmatprep.subr.mxu0 0.0
    %396 = vmatpush1.xpose.msra.mxu0 0.0
    %397 = vmatprep.subr.mxu0 0.0
    %398 = vmatpush1.xpose.msra.mxu0 0.0
    %399 = vmatprep.subr.mxu0 0.0
    %400 = vmatpush1.xpose.msra.mxu0 0.0
    %401 = vmatprep.subr.mxu0 0.0
    %402 = vmatpush1.xpose.msra.mxu0 0.0
    %403 = vmatprep.subr.mxu0 0.0
    %404 = vmatpush1.xpose.msra.mxu0 0.0
    %405 = vmatprep.subr.mxu0 0.0
    %406 = vmatpush1.xpose.msra.mxu0 0.0
    %407 = vmatprep.subr.mxu0 0.0
    %408 = vmatpush1.xpose.msra.mxu0 0.0
    %409 = vmatprep.subr.mxu0 0.0
    %410 = vmatpush1.xpose.msra.mxu0 0.0
    %411 = vmatprep.subr.mxu0 0.0
    %412 = vmatpush1.xpose.msra.mxu0 0.0
    %413 = vmatprep.subr.mxu0 0.0
    %414 = vmatpush1.xpose.msra.mxu0 0.0
    %415 = vmatprep.subr.mxu0 0.0
    %416 = vmatpush1.xpose.msra.mxu0 0.0
    %417 = vmatprep.subr.mxu0 0.0
    %418 = vmatpush1.xpose.msra.mxu0 0.0
    %419 = vmatprep.mubr.f32.mxu0 0.0
    %v420 = vand.u32 %v31, 4294901760
    %v421 = vsub.f32 %v31, %v420
    %422 = vmatmul.mubr.f32.gmra.mrb[0].mxu0 %v421
    %v423 = vpop.f32.mrb[0].mxu0
    %v424 = vadd.f32 %v320, %v423
    %v425 = vpop.f32.mrb[0].mxu0
    %426 = vdwg.mxu0
    %427 = vmatprep.subr.mxu0 0.0
    %v428 = vand.u32 %v34, 4294901760
    %429 = vmatpush1.xpose.msra.mxu0 %v428
    %430 = vmatprep.subr.mxu0 0.0
    %v431 = vand.u32 %v37, 4294901760
    %432 = vmatpush1.xpose.msra.mxu0 %v431
    %433 = vmatprep.subr.mxu0 0.0
    %v434 = vand.u32 %v40, 4294901760
    %435 = vmatpush1.xpose.msra.mxu0 %v434
    %436 = vmatprep.subr.mxu0 0.0
    %v437 = vand.u32 %v43, 4294901760
    %438 = vmatpush1.xpose.msra.mxu0 %v437
    %439 = vmatprep.subr.mxu0 0.0
    %v440 = vand.u32 %v46, 4294901760
    %441 = vmatpush1.xpose.msra.mxu0 %v440
    %442 = vmatprep.subr.mxu0 0.0
    %v443 = vand.u32 %v49, 4294901760
    %444 = vmatpush1.xpose.msra.mxu0 %v443
    %445 = vmatprep.subr.mxu0 0.0
    %v446 = vand.u32 %v52, 4294901760
    %447 = vmatpush1.xpose.msra.mxu0 %v446
    %448 = vmatprep.subr.mxu0 0.0
    %v449 = vand.u32 %v55, 4294901760
    %450 = vmatpush1.xpose.msra.mxu0 %v449
    %451 = vmatprep.subr.mxu0 0.0
    %v452 = vand.u32 %v58, 4294901760
    %453 = vmatpush1.xpose.msra.mxu0 %v452
    %454 = vmatprep.subr.mxu0 0.0
    %v455 = vand.u32 %v61, 4294901760
    %456 = vmatpush1.xpose.msra.mxu0 %v455
    %457 = vmatprep.subr.mxu0 0.0
    %v458 = vand.u32 %v64, 4294901760
    %459 = vmatpush1.xpose.msra.mxu0 %v458
    %460 = vmatprep.subr.mxu0 0.0
    %v461 = vand.u32 %v67, 4294901760
    %462 = vmatpush1.xpose.msra.mxu0 %v461
    %463 = vmatprep.subr.mxu0 0.0
    %v464 = vand.u32 %v70, 4294901760
    %465 = vmatpush1.xpose.msra.mxu0 %v464
    %466 = vmatprep.subr.mxu0 0.0
    %v467 = vand.u32 %v73, 4294901760
    %468 = vmatpush1.xpose.msra.mxu0 %v467
    %469 = vmatprep.subr.mxu0 0.0
    %v470 = vand.u32 %v76, 4294901760
    %471 = vmatpush1.xpose.msra.mxu0 %v470
    %472 = vmatprep.subr.mxu0 0.0
    %v473 = vand.u32 %v79, 4294901760
    %474 = vmatpush1.xpose.msra.mxu0 %v473
    %475 = vmatprep.subr.mxu0 0.0
    %476 = vmatpush1.xpose.msra.mxu0 0.0
    %477 = vmatprep.subr.mxu0 0.0
    %478 = vmatpush1.xpose.msra.mxu0 0.0
    %479 = vmatprep.subr.mxu0 0.0
    %480 = vmatpush1.xpose.msra.mxu0 0.0
    %481 = vmatprep.subr.mxu0 0.0
    %482 = vmatpush1.xpose.msra.mxu0 0.0
    %483 = vmatprep.subr.mxu0 0.0
    %484 = vmatpush1.xpose.msra.mxu0 0.0
    %485 = vmatprep.subr.mxu0 0.0
    %486 = vmatpush1.xpose.msra.mxu0 0.0
    %487 = vmatprep.subr.mxu0 0.0
    %488 = vmatpush1.xpose.msra.mxu0 0.0
    %489 = vmatprep.subr.mxu0 0.0
    %490 = vmatpush1.xpose.msra.mxu0 0.0
    %491 = vmatprep.subr.mxu0 0.0
    %492 = vmatpush1.xpose.msra.mxu0 0.0
    %493 = vmatprep.subr.mxu0 0.0
    %494 = vmatpush1.xpose.msra.mxu0 0.0
    %495 = vmatprep.subr.mxu0 0.0
    %496 = vmatpush1.xpose.msra.mxu0 0.0
    %497 = vmatprep.subr.mxu0 0.0
    %498 = vmatpush1.xpose.msra.mxu0 0.0
    %499 = vmatprep.subr.mxu0 0.0
    %500 = vmatpush1.xpose.msra.mxu0 0.0
    %501 = vmatprep.subr.mxu0 0.0
    %502 = vmatpush1.xpose.msra.mxu0 0.0
    %503 = vmatprep.subr.mxu0 0.0
    %504 = vmatpush1.xpose.msra.mxu0 0.0
    %505 = vmatprep.subr.mxu0 0.0
    %506 = vmatpush1.xpose.msra.mxu0 0.0
    %507 = vmatprep.mubr.f32.mxu0 0.0
    %v508 = vand.u32 %v31, 4294901760
    %v509 = vsub.f32 %v31, %v508
    %v510 = vand.u32 %v509, 4294901760
    %511 = vmatmul.mubr.f32.gmra.mrb[0].mxu0 %v510
    %v512 = vpop.f32.mrb[0].mxu0
    %v513 = vadd.f32 %v424, %v512
    %v514 = vpop.f32.mrb[0].mxu0
    %515 = vdwg.mxu0
    %516 = vmatprep.subr.mxu0 0.0
    %v517 = vand.u32 %v34, 4294901760
    %v518 = vsub.f32 %v34, %v517
    %v519 = vand.u32 %v518, 4294901760
    %520 = vmatpush1.xpose.msra.mxu0 %v519
    %521 = vmatprep.subr.mxu0 0.0
    %v522 = vand.u32 %v37, 4294901760
    %v523 = vsub.f32 %v37, %v522
    %v524 = vand.u32 %v523, 4294901760
    %525 = vmatpush1.xpose.msra.mxu0 %v524
    %526 = vmatprep.subr.mxu0 0.0
    %v527 = vand.u32 %v40, 4294901760
    %v528 = vsub.f32 %v40, %v527
    %v529 = vand.u32 %v528, 4294901760
    %530 = vmatpush1.xpose.msra.mxu0 %v529
    %531 = vmatprep.subr.mxu0 0.0
    %v532 = vand.u32 %v43, 4294901760
    %v533 = vsub.f32 %v43, %v532
    %v534 = vand.u32 %v533, 4294901760
    %535 = vmatpush1.xpose.msra.mxu0 %v534
    %536 = vmatprep.subr.mxu0 0.0
    %v537 = vand.u32 %v46, 4294901760
    %v538 = vsub.f32 %v46, %v537
    %v539 = vand.u32 %v538, 4294901760
    %540 = vmatpush1.xpose.msra.mxu0 %v539
    %541 = vmatprep.subr.mxu0 0.0
    %v542 = vand.u32 %v49, 4294901760
    %v543 = vsub.f32 %v49, %v542
    %v544 = vand.u32 %v543, 4294901760
    %545 = vmatpush1.xpose.msra.mxu0 %v544
    %546 = vmatprep.subr.mxu0 0.0
    %v547 = vand.u32 %v52, 4294901760
    %v548 = vsub.f32 %v52, %v547
    %v549 = vand.u32 %v548, 4294901760
    %550 = vmatpush1.xpose.msra.mxu0 %v549
    %551 = vmatprep.subr.mxu0 0.0
    %v552 = vand.u32 %v55, 4294901760
    %v553 = vsub.f32 %v55, %v552
    %v554 = vand.u32 %v553, 4294901760
    %555 = vmatpush1.xpose.msra.mxu0 %v554
    %556 = vmatprep.subr.mxu0 0.0
    %v557 = vand.u32 %v58, 4294901760
    %v558 = vsub.f32 %v58, %v557
    %v559 = vand.u32 %v558, 4294901760
    %560 = vmatpush1.xpose.msra.mxu0 %v559
    %561 = vmatprep.subr.mxu0 0.0
    %v562 = vand.u32 %v61, 4294901760
    %v563 = vsub.f32 %v61, %v562
    %v564 = vand.u32 %v563, 4294901760
    %565 = vmatpush1.xpose.msra.mxu0 %v564
    %566 = vmatprep.subr.mxu0 0.0
    %v567 = vand.u32 %v64, 4294901760
    %v568 = vsub.f32 %v64, %v567
    %v569 = vand.u32 %v568, 4294901760
    %570 = vmatpush1.xpose.msra.mxu0 %v569
    %571 = vmatprep.subr.mxu0 0.0
    %v572 = vand.u32 %v67, 4294901760
    %v573 = vsub.f32 %v67, %v572
    %v574 = vand.u32 %v573, 4294901760
    %575 = vmatpush1.xpose.msra.mxu0 %v574
    %576 = vmatprep.subr.mxu0 0.0
    %v577 = vand.u32 %v70, 4294901760
    %v578 = vsub.f32 %v70, %v577
    %v579 = vand.u32 %v578, 4294901760
    %580 = vmatpush1.xpose.msra.mxu0 %v579
    %581 = vmatprep.subr.mxu0 0.0
    %v582 = vand.u32 %v73, 4294901760
    %v583 = vsub.f32 %v73, %v582
    %v584 = vand.u32 %v583, 4294901760
    %585 = vmatpush1.xpose.msra.mxu0 %v584
    %586 = vmatprep.subr.mxu0 0.0
    %v587 = vand.u32 %v76, 4294901760
    %v588 = vsub.f32 %v76, %v587
    %v589 = vand.u32 %v588, 4294901760
    %590 = vmatpush1.xpose.msra.mxu0 %v589
    %591 = vmatprep.subr.mxu0 0.0
    %v592 = vand.u32 %v79, 4294901760
    %v593 = vsub.f32 %v79, %v592
    %v594 = vand.u32 %v593, 4294901760
    %595 = vmatpush1.xpose.msra.mxu0 %v594
    %596 = vmatprep.subr.mxu0 0.0
    %597 = vmatpush1.xpose.msra.mxu0 0.0
    %598 = vmatprep.subr.mxu0 0.0
    %599 = vmatpush1.xpose.msra.mxu0 0.0
    %600 = vmatprep.subr.mxu0 0.0
    %601 = vmatpush1.xpose.msra.mxu0 0.0
    %602 = vmatprep.subr.mxu0 0.0
    %603 = vmatpush1.xpose.msra.mxu0 0.0
    %604 = vmatprep.subr.mxu0 0.0
    %605 = vmatpush1.xpose.msra.mxu0 0.0
    %606 = vmatprep.subr.mxu0 0.0
    %607 = vmatpush1.xpose.msra.mxu0 0.0
    %608 = vmatprep.subr.mxu0 0.0
    %609 = vmatpush1.xpose.msra.mxu0 0.0
    %610 = vmatprep.subr.mxu0 0.0
    %611 = vmatpush1.xpose.msra.mxu0 0.0
    %612 = vmatprep.subr.mxu0 0.0
    %613 = vmatpush1.xpose.msra.mxu0 0.0
    %614 = vmatprep.subr.mxu0 0.0
    %615 = vmatpush1.xpose.msra.mxu0 0.0
    %616 = vmatprep.subr.mxu0 0.0
    %617 = vmatpush1.xpose.msra.mxu0 0.0
    %618 = vmatprep.subr.mxu0 0.0
    %619 = vmatpush1.xpose.msra.mxu0 0.0
    %620 = vmatprep.subr.mxu0 0.0
    %621 = vmatpush1.xpose.msra.mxu0 0.0
    %622 = vmatprep.subr.mxu0 0.0
    %623 = vmatpush1.xpose.msra.mxu0 0.0
    %624 = vmatprep.subr.mxu0 0.0
    %625 = vmatpush1.xpose.msra.mxu0 0.0
    %626 = vmatprep.subr.mxu0 0.0
    %627 = vmatpush1.xpose.msra.mxu0 0.0
    %628 = vmatprep.mubr.f32.mxu0 0.0
    %v629 = vand.u32 %v31, 4294901760
    %630 = vmatmul.mubr.f32.gmra.mrb[0].mxu0 %v629
    %v631 = vpop.f32.mrb[0].mxu0
    %v632 = vadd.f32 %v513, %v631
    %v633 = vpop.f32.mrb[0].mxu0
    %634 = vdwg.mxu0
    %635 = vmatprep.subr.mxu0 0.0
    %v636 = vand.u32 %v34, 4294901760
    %637 = vmatpush1.xpose.msra.mxu0 %v636
    %638 = vmatprep.subr.mxu0 0.0
    %v639 = vand.u32 %v37, 4294901760
    %640 = vmatpush1.xpose.msra.mxu0 %v639
    %641 = vmatprep.subr.mxu0 0.0
    %v642 = vand.u32 %v40, 4294901760
    %643 = vmatpush1.xpose.msra.mxu0 %v642
    %644 = vmatprep.subr.mxu0 0.0
    %v645 = vand.u32 %v43, 4294901760
    %646 = vmatpush1.xpose.msra.mxu0 %v645
    %647 = vmatprep.subr.mxu0 0.0
    %v648 = vand.u32 %v46, 4294901760
    %649 = vmatpush1.xpose.msra.mxu0 %v648
    %650 = vmatprep.subr.mxu0 0.0
    %v651 = vand.u32 %v49, 4294901760
    %652 = vmatpush1.xpose.msra.mxu0 %v651
    %653 = vmatprep.subr.mxu0 0.0
    %v654 = vand.u32 %v52, 4294901760
    %655 = vmatpush1.xpose.msra.mxu0 %v654
    %656 = vmatprep.subr.mxu0 0.0
    %v657 = vand.u32 %v55, 4294901760
    %658 = vmatpush1.xpose.msra.mxu0 %v657
    %659 = vmatprep.subr.mxu0 0.0
    %v660 = vand.u32 %v58, 4294901760
    %661 = vmatpush1.xpose.msra.mxu0 %v660
    %662 = vmatprep.subr.mxu0 0.0
    %v663 = vand.u32 %v61, 4294901760
    %664 = vmatpush1.xpose.msra.mxu0 %v663
    %665 = vmatprep.subr.mxu0 0.0
    %v666 = vand.u32 %v64, 4294901760
    %667 = vmatpush1.xpose.msra.mxu0 %v666
    %668 = vmatprep.subr.mxu0 0.0
    %v669 = vand.u32 %v67, 4294901760
    %670 = vmatpush1.xpose.msra.mxu0 %v669
    %671 = vmatprep.subr.mxu0 0.0
    %v672 = vand.u32 %v70, 4294901760
    %673 = vmatpush1.xpose.msra.mxu0 %v672
    %674 = vmatprep.subr.mxu0 0.0
    %v675 = vand.u32 %v73, 4294901760
    %676 = vmatpush1.xpose.msra.mxu0 %v675
    %677 = vmatprep.subr.mxu0 0.0
    %v678 = vand.u32 %v76, 4294901760
    %679 = vmatpush1.xpose.msra.mxu0 %v678
    %680 = vmatprep.subr.mxu0 0.0
    %v681 = vand.u32 %v79, 4294901760
    %682 = vmatpush1.xpose.msra.mxu0 %v681
    %683 = vmatprep.subr.mxu0 0.0
    %684 = vmatpush1.xpose.msra.mxu0 0.0
    %685 = vmatprep.subr.mxu0 0.0
    %686 = vmatpush1.xpose.msra.mxu0 0.0
    %687 = vmatprep.subr.mxu0 0.0
    %688 = vmatpush1.xpose.msra.mxu0 0.0
    %689 = vmatprep.subr.mxu0 0.0
    %690 = vmatpush1.xpose.msra.mxu0 0.0
    %691 = vmatprep.subr.mxu0 0.0
    %692 = vmatpush1.xpose.msra.mxu0 0.0
    %693 = vmatprep.subr.mxu0 0.0
    %694 = vmatpush1.xpose.msra.mxu0 0.0
    %695 = vmatprep.subr.mxu0 0.0
    %696 = vmatpush1.xpose.msra.mxu0 0.0
    %697 = vmatprep.subr.mxu0 0.0
    %698 = vmatpush1.xpose.msra.mxu0 0.0
    %699 = vmatprep.subr.mxu0 0.0
    %700 = vmatpush1.xpose.msra.mxu0 0.0
    %701 = vmatprep.subr.mxu0 0.0
    %702 = vmatpush1.xpose.msra.mxu0 0.0
    %703 = vmatprep.subr.mxu0 0.0
    %704 = vmatpush1.xpose.msra.mxu0 0.0
    %705 = vmatprep.subr.mxu0 0.0
    %706 = vmatpush1.xpose.msra.mxu0 0.0
    %707 = vmatprep.subr.mxu0 0.0
    %708 = vmatpush1.xpose.msra.mxu0 0.0
    %709 = vmatprep.subr.mxu0 0.0
    %710 = vmatpush1.xpose.msra.mxu0 0.0
    %711 = vmatprep.subr.mxu0 0.0
    %712 = vmatpush1.xpose.msra.mxu0 0.0
    %713 = vmatprep.subr.mxu0 0.0
    %714 = vmatpush1.xpose.msra.mxu0 0.0
    %715 = vmatprep.mubr.f32.mxu0 0.0
    %v716 = vand.u32 %v31, 4294901760
    %717 = vmatmul.mubr.f32.gmra.mrb[0].mxu0 %v716
    %v718 = vpop.f32.mrb[0].mxu0
    %v719 = vadd.f32 %v632, %v718
    %v720 = vpop.f32.mrb[0].mxu0
    %721 = vdwg.mxu0
    %722 = vst [vmem:[#allocation2] sm:$0xf] %v719
    // Predicated region
    $region10: #{tpu_custom_call.1} parent=1 // pred_check
      _
    $region11: #{tpu_custom_call.1} parent=1 // pred_check_branch
      %724 = sbr.rel (0) target = $region13
    $region12: #{tpu_custom_call.1} parent=1 // pred_region
      %s726 = ssub.s32 64, 64
      %727 = vsyncadd [#allocation3], %s726
      %s729 = sshll.u32 [#allocation2], 4
      %s730 = int_to_ptr.vmem [resolvable:$true] %s729
      %732 = dma.vmem_to_hbm [thread:$0]  %s730, 64, %s2, [#allocation3]
    $region13: #{tpu_custom_call.1} parent=1 // pred_fallthru
      _
    // Predicated region
    $region14: #{tpu_custom_call.1} parent=1 // pred_check
      _
    $region15: #{tpu_custom_call.1} parent=1 // pred_check_branch
      %734 = sbr.rel (0) target = $region17
    $region16: #{tpu_custom_call.1} parent=1 // pred_region
      %735 = dma.done [#allocation3], 64
    $region17: #{tpu_custom_call.1} parent=1 // pred_fallthru
      _
    %736 = vsyncpa [#allocation3], 1

</llo_original>
